<compile_context>
chip_gen: v7x
topology: tpu7x:2x2x1
jax: 0.10.0
libtpu: 0.0.40
codegen_flags: <defaults>
</compile_context>

<pallas_src>
import functools

import jax
import jax.numpy as jnp
from jax.experimental import pallas as pl
from jax.experimental.pallas import tpu as pltpu


# Tile targets (sized for the 64 MiB v7x VMEM budget; tiny on v5e/v6e too).
_TM = 256   # rows of the flattened (samples*batch) dimension (sublane axis)
_TN = 512   # n_output (lane) tile
_TK = 512   # n_input (reduction) tile
_TS = 8     # samples per grid step in the 2-D broadcast-FMA kernel


def _pick_tile(dim, target, multiple):
    """Largest tile <= target that divides `dim` and is a multiple of
    `multiple`; falls back to the full dimension (always a legal block)."""
    if dim <= target:
        return dim
    t = (target // multiple) * multiple
    while t >= multiple:
        if dim % t == 0:
            return t
        t -= multiple
    return dim


def _vmem_limit(working_set_bytes):
    """Explicit scoped-VMEM limit: 2x the estimated working set, floor 32 MiB,
    clamped to 48 MiB so it still has headroom on v7x (64 MiB physical)."""
    return int(min(max(2 * working_set_bytes, 32 << 20), 48 << 20))


# ----------------------------------------------------------------------------
# Kernels
# ----------------------------------------------------------------------------
def _gamma_sdelta_kernel(x_ref, wm_ref, wv_ref, bm_ref, bv_ref,
                         gamma_ref, sdelta_ref, acc_g, acc_d):
    """2-D path, phase A: gamma / sqrt(delta) for one (batch, TN) output tile.

    grid = (n_out tiles, n_in tiles). Axis 1 (K) is the reduction: f32
    accumulators are zeroed on k == 0 and finalized (bias add, sqrt) on the
    last k. MXU inputs are bf16; accumulation is f32.
    """
    k = pl.program_id(1)

    @pl.when(k == 0)
    def _():
        acc_g[...] = jnp.zeros_like(acc_g)
        acc_d[...] = jnp.zeros_like(acc_d)

    x = x_ref[...]                                          # (B, tk) f32
    acc_g[...] += jnp.dot(x.astype(jnp.bfloat16), wm_ref[...],
                          preferred_element_type=jnp.float32)
    acc_d[...] += jnp.dot((x * x).astype(jnp.bfloat16), wv_ref[...],
                          preferred_element_type=jnp.float32)

    @pl.when(k == pl.num_programs(1) - 1)
    def _():
        gamma_ref[...] = acc_g[...] + bm_ref[...]
        sdelta_ref[...] = jnp.sqrt(acc_d[...] + bv_ref[...])


def _broadcast_fma_kernel(gamma_ref, sdelta_ref, z_ref, o_ref):
    """2-D path, phase B: out[s] = gamma + sqrt(delta) * z[s] on a lane-dense
    (S_blk, B, TN) tile. Purely elementwise; both grid axes are parallel."""
    # (B, tn) broadcasts against (S_blk, B, tn) along the leading sample dim.
    o_ref[...] = gamma_ref[...] + sdelta_ref[...] * z_ref[...]


def _mfvi_flat_kernel(x_ref, wm_ref, wv_ref, bm_ref, bv_ref, z_ref, o_ref,
                      acc_g, acc_d):
    """3-D path with (no_samples, batch) flattened into the matmul M dim.

    grid = (M tiles, n_out tiles, n_in tiles). Axis 2 (K) is the reduction;
    the lane-dense output tile is written once on the last K step.
    """
    k = pl.program_id(2)

    @pl.when(k == 0)
    def _():
        acc_g[...] = jnp.zeros_like(acc_g)
        acc_d[...] = jnp.zeros_like(acc_d)

    x = x_ref[...]                                          # (tm, tk) f32
    acc_g[...] += jnp.dot(x.astype(jnp.bfloat16), wm_ref[...],
                          preferred_element_type=jnp.float32)
    acc_d[...] += jnp.dot((x * x).astype(jnp.bfloat16), wv_ref[...],
                          preferred_element_type=jnp.float32)

    @pl.when(k == pl.num_programs(2) - 1)
    def _():
        gamma = acc_g[...] + bm_ref[...]
        sdelta = jnp.sqrt(acc_d[...] + bv_ref[...])
        o_ref[...] = (gamma + sdelta * z_ref[...]).astype(o_ref.dtype)


# ----------------------------------------------------------------------------
# Wrapper
# ----------------------------------------------------------------------------
@functools.partial(jax.jit, static_argnames=("no_samples",))
def mfvi_linear_forward(x, params, z, no_samples):
    """MFVI linear layer forward pass (shared_weights=False)."""
    w_mean, w_logvar, b_mean, b_logvar = params
    n_in, n_out = w_mean.shape

    # Hoist exp(W_logvar) out of the kernel grid (one pass over the weights,
    # independent of no_samples) and cast MXU operands to bf16 once here:
    # halves weight HBM DMA / VMEM footprint; accumulation stays f32 in-kernel.
    wm_bf = w_mean.astype(jnp.bfloat16)
    wv_bf = jnp.exp(w_logvar).astype(jnp.bfloat16)
    bm = b_mean.astype(jnp.float32).reshape(1, n_out)
    bv = jnp.exp(b_logvar.astype(jnp.float32)).reshape(1, n_out)

    tn = _pick_tile(n_out, _TN, 128)
    tk = _pick_tile(n_in, _TK, 128)
    gn, gk = n_out // tn, n_in // tk

    if x.ndim == 2:
        batch = x.shape[0]

        # ---- phase A: gamma / sqrt(delta), computed ONCE (as in PyTorch) ---
        ws_a = (2 * batch * tk * 4           # x tiles (double-buffered, f32)
                + 2 * 2 * tk * tn * 2        # two bf16 weight tiles
                + 2 * 2 * tn * 4             # bias tiles
                + 2 * 2 * batch * tn * 4     # gamma / sdelta output tiles
                + 2 * batch * tn * 4)        # accumulator scratch
        gamma, sdelta = pl.pallas_call(
            _gamma_sdelta_kernel,
            out_shape=(jax.ShapeDtypeStruct((batch, n_out), jnp.float32),
                       jax.ShapeDtypeStruct((batch, n_out), jnp.float32)),
            grid_spec=pltpu.PrefetchScalarGridSpec(
                num_scalar_prefetch=0,
                grid=(gn, gk),
                in_specs=[
                    pl.BlockSpec((batch, tk), lambda n, k: (0, k)),   # x
                    pl.BlockSpec((tk, tn), lambda n, k: (k, n)),      # W_mean
                    pl.BlockSpec((tk, tn), lambda n, k: (k, n)),      # W_var
                    pl.BlockSpec((1, tn), lambda n, k: (0, n)),       # b_mean
                    pl.BlockSpec((1, tn), lambda n, k: (0, n)),       # b_var
                ],
                out_specs=(
                    pl.BlockSpec((batch, tn), lambda n, k: (0, n)),
                    pl.BlockSpec((batch, tn), lambda n, k: (0, n)),
                ),
                scratch_shapes=[pltpu.VMEM((batch, tn), jnp.float32),
                                pltpu.VMEM((batch, tn), jnp.float32)],
            ),
            compiler_params=pltpu.CompilerParams(
                dimension_semantics=("parallel", "arbitrary"),
                vmem_limit_bytes=_vmem_limit(ws_a)),
        )(x, wm_bf, wv_bf, bm, bv)

        # ---- phase B: out[s] = gamma + sqrt(delta) * z[s] ------------------
        ts = _pick_tile(no_samples, _TS, 1)
        gs = no_samples // ts
        ws_b = 2 * (2 * batch * tn * 4 + 2 * ts * batch * tn * 4)
        return pl.pallas_call(
            _broadcast_fma_kernel,
            out_shape=jax.ShapeDtypeStruct((no_samples, batch, n_out),
                                           jnp.float32),
            grid_spec=pltpu.PrefetchScalarGridSpec(
                num_scalar_prefetch=0,
                grid=(gs, gn),
                in_specs=[
                    pl.BlockSpec((batch, tn), lambda s, n: (0, n)),   # gamma
                    pl.BlockSpec((batch, tn), lambda s, n: (0, n)),   # sdelta
                    pl.BlockSpec((ts, batch, tn), lambda s, n: (s, 0, n)),  # z
                ],
                out_specs=pl.BlockSpec((ts, batch, tn),
                                       lambda s, n: (s, 0, n)),
            ),
            compiler_params=pltpu.CompilerParams(
                dimension_semantics=("parallel", "parallel"),
                vmem_limit_bytes=_vmem_limit(ws_b)),
        )(gamma, sdelta, z)

    elif x.ndim == 3:
        assert x.shape[0] == no_samples
        batch = x.shape[1]
        m = no_samples * batch
        x_flat = x.reshape(m, n_in)
        z_flat = z.reshape(m, n_out)

        tm = _pick_tile(m, _TM, 8)
        gm = m // tm
        ws = (2 * tm * tk * 4                # x tiles (double-buffered, f32)
              + 2 * 2 * tk * tn * 2          # two bf16 weight tiles
              + 2 * 2 * tn * 4               # bias tiles
              + 2 * tm * tn * 4              # z tiles
              + 2 * tm * tn * 4              # output tiles
              + 2 * tm * tn * 4)             # accumulator scratch
        out_flat = pl.pallas_call(
            _mfvi_flat_kernel,
            out_shape=jax.ShapeDtypeStruct((m, n_out), jnp.float32),
            grid_spec=pltpu.PrefetchScalarGridSpec(
                num_scalar_prefetch=0,
                grid=(gm, gn, gk),
                in_specs=[
                    pl.BlockSpec((tm, tk), lambda i, n, k: (i, k)),   # x
                    pl.BlockSpec((tk, tn), lambda i, n, k: (k, n)),   # W_mean
                    pl.BlockSpec((tk, tn), lambda i, n, k: (k, n)),   # W_var
                    pl.BlockSpec((1, tn), lambda i, n, k: (0, n)),    # b_mean
                    pl.BlockSpec((1, tn), lambda i, n, k: (0, n)),    # b_var
                    pl.BlockSpec((tm, tn), lambda i, n, k: (i, n)),   # z
                ],
                out_specs=pl.BlockSpec((tm, tn), lambda i, n, k: (i, n)),
                scratch_shapes=[pltpu.VMEM((tm, tn), jnp.float32),
                                pltpu.VMEM((tm, tn), jnp.float32)],
            ),
            compiler_params=pltpu.CompilerParams(
                dimension_semantics=("parallel", "parallel", "arbitrary"),
                vmem_limit_bytes=_vmem_limit(ws)),
        )(x_flat, wm_bf, wv_bf, bm, bv, z_flat)
        return out_flat.reshape(no_samples, batch, n_out)

    else:
        raise ValueError("x must be 2-D or 3-D")


# ----------------------------------------------------------------------------
# Reference (plain JAX, f32) for verification
# ----------------------------------------------------------------------------
def mfvi_reference(x, params, z):
    w_mean, w_logvar, b_mean, b_logvar = params
    w_var = jnp.exp(w_logvar)
    b_var = jnp.exp(b_logvar)
    if x.ndim == 2:
        gamma = x @ w_mean + b_mean[None, :]
        delta = (x ** 2) @ w_var + b_var[None, :]
        return gamma[None] + jnp.sqrt(delta)[None] * z
    else:
        gamma = jnp.einsum("sbi,io->sbo", x, w_mean) + b_mean[None, None, :]
        delta = jnp.einsum("sbi,io->sbo", x ** 2, w_var) + b_var[None, None, :]
        return gamma + jnp.sqrt(delta) * z


# ----------------------------------------------------------------------------
# Deterministic parameter init (mirrors MFVI_Linear_Layer.__init__)
# ----------------------------------------------------------------------------
def init_params(key, n_input, n_output, omega=1.0):
    k1, k2, k3, k4 = jax.random.split(key, 4)
    w_mean = jax.random.normal(k1, (n_input, n_output), jnp.float32) / jnp.sqrt(
        4.0 * n_output)
    w_logvar = -11.5 + 1e-10 * jax.random.normal(k2, (n_input, n_output),
                                                 jnp.float32)
    b_mean = 1e-10 * jax.random.normal(k3, (n_output,), jnp.float32)
    b_logvar = -11.5 + 1e-10 * jax.random.normal(k4, (n_output,), jnp.float32)
    # prior_logvar = 2*log(omega) only matters for KL(), not the forward pass.
    return (w_mean, w_logvar, b_mean, b_logvar)


if __name__ == "__main__":
    n_input, n_output = 64, 128
    batch, no_samples = 8, 4

    key = jax.random.PRNGKey(0)
    kp, kx, kz, kx3, kz3 = jax.random.split(key, 5)

    params = init_params(kp, n_input, n_output, omega=1.0)

    # Tolerance note: matmul operands are cast to bf16 for the MXU (f32
    # accumulation), so comparison against the pure-f32 reference is at ~1e-3
    # absolute error for O(1) activations; 2e-2 is a comfortable bound.
    ATOL = RTOL = 2e-2

    # --- 2-D (first-layer) path ---
    x2 = jax.random.normal(kx, (batch, n_input), jnp.float32)
    z2 = jax.random.normal(kz, (no_samples, batch, n_output), jnp.float32)
    out2 = jax.block_until_ready(mfvi_linear_forward(x2, params, z2, no_samples))
    ref2 = mfvi_reference(x2, params, z2)
    assert out2.shape == (no_samples, batch, n_output)
    assert jnp.allclose(out2, ref2, atol=ATOL, rtol=RTOL), (
        float(jnp.max(jnp.abs(out2 - ref2))))

    # --- 3-D (deeper-layer) path ---
    x3 = jax.random.normal(kx3, (no_samples, batch, n_input), jnp.float32)
    z3 = jax.random.normal(kz3, (no_samples, batch, n_output), jnp.float32)
    out3 = jax.block_until_ready(mfvi_linear_forward(x3, params, z3, no_samples))
    ref3 = mfvi_reference(x3, params, z3)
    assert out3.shape == (no_samples, batch, n_output)
    assert jnp.allclose(out3, ref3, atol=ATOL, rtol=RTOL), (
        float(jnp.max(jnp.abs(out3 - ref3))))

    print("KERNEL_OK")
</pallas_src>

<mosaic_0001>
module attributes {stable_mosaic.version = 11 : i64} {
  func.func @_gamma_sdelta_kernel(%arg0: i32, %arg1: i32, %arg2: memref<8x64xf32, #tpu.memory_space<vmem>>, %arg3: memref<64x128xbf16, #tpu.memory_space<vmem>>, %arg4: memref<64x128xbf16, #tpu.memory_space<vmem>>, %arg5: memref<1x128xf32, #tpu.memory_space<vmem>>, %arg6: memref<1x128xf32, #tpu.memory_space<vmem>>, %arg7: memref<8x128xf32, #tpu.memory_space<vmem>>, %arg8: memref<8x128xf32, #tpu.memory_space<vmem>>, %arg9: memref<8x128xf32, #tpu.memory_space<vmem>>, %arg10: memref<8x128xf32, #tpu.memory_space<vmem>>) attributes {dimension_semantics = [#tpu.dimension_semantics<parallel>, #tpu.dimension_semantics<arbitrary>], iteration_bounds = array<i64: 1, 1>, scalar_prefetch = 0 : i64, scratch_operands = 2 : i64, tpu.core_type = #tpu.core_type<tc>, window_params = [{transform_indices = @transform_0, window_bounds = array<i64: 8, 64>}, {transform_indices = @transform_1, window_bounds = array<i64: 64, 128>}, {transform_indices = @transform_2, window_bounds = array<i64: 64, 128>}, {transform_indices = @transform_3, window_bounds = array<i64: 1, 128>}, {transform_indices = @transform_4, window_bounds = array<i64: 1, 128>}, {transform_indices = @transform_5, window_bounds = array<i64: 8, 128>}, {transform_indices = @transform_6, window_bounds = array<i64: 8, 128>}]} {
    %c0_i32 = arith.constant 0 : i32
    %0 = arith.cmpi eq, %arg1, %c0_i32 : i32
    %1 = arith.extui %0 : i1 to i32
    %c0_i32_0 = arith.constant 0 : i32
    %2 = arith.cmpi ne, %1, %c0_i32_0 : i32
    scf.if %2 {
      %cst_17 = arith.constant 0.000000e+00 : f32
      %20 = vector.broadcast %cst_17 : f32 to vector<8x128xf32>
      %c0_18 = arith.constant 0 : index
      %c0_19 = arith.constant 0 : index
      %21 = vector.load %arg9[%c0_18, %c0_19] : memref<8x128xf32, #tpu.memory_space<vmem>>, vector<8x128xf32>
      tpu.vector_store %arg9[%c0_18, %c0_19], %20 {strides = array<i32>} : memref<8x128xf32, #tpu.memory_space<vmem>>, vector<8x128xf32>,
      %cst_20 = arith.constant 0.000000e+00 : f32
      %22 = vector.broadcast %cst_20 : f32 to vector<8x128xf32>
      %c0_21 = arith.constant 0 : index
      %c0_22 = arith.constant 0 : index
      %23 = vector.load %arg10[%c0_21, %c0_22] : memref<8x128xf32, #tpu.memory_space<vmem>>, vector<8x128xf32>
      tpu.vector_store %arg10[%c0_21, %c0_22], %22 {strides = array<i32>} : memref<8x128xf32, #tpu.memory_space<vmem>>, vector<8x128xf32>,
    } else {
    }
    %c0 = arith.constant 0 : index
    %c0_1 = arith.constant 0 : index
    %3 = vector.load %arg2[%c0, %c0_1] : memref<8x64xf32, #tpu.memory_space<vmem>>, vector<8x64xf32>
    %c0_2 = arith.constant 0 : index
    %c0_3 = arith.constant 0 : index
    %4 = vector.load %arg9[%c0_2, %c0_3] : memref<8x128xf32, #tpu.memory_space<vmem>>, vector<8x128xf32>
    %5 = arith.truncf %3 : vector<8x64xf32> to vector<8x64xbf16>
    %c0_4 = arith.constant 0 : index
    %c0_5 = arith.constant 0 : index
    %6 = vector.load %arg3[%c0_4, %c0_5] : memref<64x128xbf16, #tpu.memory_space<vmem>>, vector<64x128xbf16>
    %cst = arith.constant dense<0.000000e+00> : vector<8x128xf32>
    %7 = tpu.matmul %5, %6, %cst {dimension_numbers = #tpu.dot_dimension_numbers<[1], [0], [0], [1], [0, 0, 1, 1], [], []>} : vector<8x64xbf16>, vector<64x128xbf16>, vector<8x128xf32> -> vector<8x128xf32>
    %8 = arith.addf %4, %7 : vector<8x128xf32>
    %c0_6 = arith.constant 0 : index
    %c0_7 = arith.constant 0 : index
    %9 = vector.load %arg9[%c0_6, %c0_7] : memref<8x128xf32, #tpu.memory_space<vmem>>, vector<8x128xf32>
    tpu.vector_store %arg9[%c0_6, %c0_7], %8 {strides = array<i32>} : memref<8x128xf32, #tpu.memory_space<vmem>>, vector<8x128xf32>,
    %c0_8 = arith.constant 0 : index
    %c0_9 = arith.constant 0 : index
    %10 = vector.load %arg10[%c0_8, %c0_9] : memref<8x128xf32, #tpu.memory_space<vmem>>, vector<8x128xf32>
    %11 = arith.mulf %3, %3 : vector<8x64xf32>
    %12 = arith.truncf %11 : vector<8x64xf32> to vector<8x64xbf16>
    %c0_10 = arith.constant 0 : index
    %c0_11 = arith.constant 0 : index
    %13 = vector.load %arg4[%c0_10, %c0_11] : memref<64x128xbf16, #tpu.memory_space<vmem>>, vector<64x128xbf16>
    %cst_12 = arith.constant dense<0.000000e+00> : vector<8x128xf32>
    %14 = tpu.matmul %12, %13, %cst_12 {dimension_numbers = #tpu.dot_dimension_numbers<[1], [0], [0], [1], [0, 0, 1, 1], [], []>} : vector<8x64xbf16>, vector<64x128xbf16>, vector<8x128xf32> -> vector<8x128xf32>
    %15 = arith.addf %10, %14 : vector<8x128xf32>
    %c0_13 = arith.constant 0 : index
    %c0_14 = arith.constant 0 : index
    %16 = vector.load %arg10[%c0_13, %c0_14] : memref<8x128xf32, #tpu.memory_space<vmem>>, vector<8x128xf32>
    tpu.vector_store %arg10[%c0_13, %c0_14], %15 {strides = array<i32>} : memref<8x128xf32, #tpu.memory_space<vmem>>, vector<8x128xf32>,
    %c0_i32_15 = arith.constant 0 : i32
    %17 = arith.cmpi eq, %arg1, %c0_i32_15 : i32
    %18 = arith.extui %17 : i1 to i32
    %c0_i32_16 = arith.constant 0 : i32
    %19 = arith.cmpi ne, %18, %c0_i32_16 : i32
    scf.if %19 {
      %c0_17 = arith.constant 0 : index
      %c0_18 = arith.constant 0 : index
      %20 = vector.load %arg9[%c0_17, %c0_18] : memref<8x128xf32, #tpu.memory_space<vmem>>, vector<8x128xf32>
      %c0_19 = arith.constant 0 : index
      %c0_20 = arith.constant 0 : index
      %21 = vector.load %arg5[%c0_19, %c0_20] : memref<1x128xf32, #tpu.memory_space<vmem>>, vector<1x128xf32>
      %22 = vector.broadcast %21 : vector<1x128xf32> to vector<8x128xf32>
      %23 = arith.addf %20, %22 : vector<8x128xf32>
      %c0_21 = arith.constant 0 : index
      %c0_22 = arith.constant 0 : index
      %24 = vector.load %arg7[%c0_21, %c0_22] : memref<8x128xf32, #tpu.memory_space<vmem>>, vector<8x128xf32>
      tpu.vector_store %arg7[%c0_21, %c0_22], %23 {strides = array<i32>} : memref<8x128xf32, #tpu.memory_space<vmem>>, vector<8x128xf32>,
      %c0_23 = arith.constant 0 : index
      %c0_24 = arith.constant 0 : index
      %25 = vector.load %arg10[%c0_23, %c0_24] : memref<8x128xf32, #tpu.memory_space<vmem>>, vector<8x128xf32>
      %c0_25 = arith.constant 0 : index
      %c0_26 = arith.constant 0 : index
      %26 = vector.load %arg6[%c0_25, %c0_26] : memref<1x128xf32, #tpu.memory_space<vmem>>, vector<1x128xf32>
      %27 = vector.broadcast %26 : vector<1x128xf32> to vector<8x128xf32>
      %28 = arith.addf %25, %27 : vector<8x128xf32>
      %29 = math.sqrt %28 : vector<8x128xf32>
      %c0_27 = arith.constant 0 : index
      %c0_28 = arith.constant 0 : index
      %30 = vector.load %arg8[%c0_27, %c0_28] : memref<8x128xf32, #tpu.memory_space<vmem>>, vector<8x128xf32>
      tpu.vector_store %arg8[%c0_27, %c0_28], %29 {strides = array<i32>} : memref<8x128xf32, #tpu.memory_space<vmem>>, vector<8x128xf32>,
    } else {
    }
    return
  }
  func.func @transform_0(%arg0: i32, %arg1: i32) -> (i32, i32) {
    %c0_i32 = arith.constant 0 : i32
    %c0_i32_0 = arith.constant 0 : i32
    return %c0_i32, %arg1 : i32, i32
  }
  func.func @transform_1(%arg0: i32, %arg1: i32) -> (i32, i32) {
    %c0_i32 = arith.constant 0 : i32
    return %arg1, %arg0 : i32, i32
  }
  func.func @transform_2(%arg0: i32, %arg1: i32) -> (i32, i32) {
    %c0_i32 = arith.constant 0 : i32
    return %arg1, %arg0 : i32, i32
  }
  func.func @transform_3(%arg0: i32, %arg1: i32) -> (i32, i32) {
    %c0_i32 = arith.constant 0 : i32
    %c0_i32_0 = arith.constant 0 : i32
    return %c0_i32, %arg0 : i32, i32
  }
  func.func @transform_4(%arg0: i32, %arg1: i32) -> (i32, i32) {
    %c0_i32 = arith.constant 0 : i32
    %c0_i32_0 = arith.constant 0 : i32
    return %c0_i32, %arg0 : i32, i32
  }
  func.func @transform_5(%arg0: i32, %arg1: i32) -> (i32, i32) {
    %c0_i32 = arith.constant 0 : i32
    %c0_i32_0 = arith.constant 0 : i32
    return %c0_i32, %arg0 : i32, i32
  }
  func.func @transform_6(%arg0: i32, %arg1: i32) -> (i32, i32) {
    %c0_i32 = arith.constant 0 : i32
    %c0_i32_0 = arith.constant 0 : i32
    return %c0_i32, %arg0 : i32, i32
  }
}

module attributes {stable_mosaic.version = 11 : i64} {
  func.func @_broadcast_fma_kernel(%arg0: i32, %arg1: i32, %arg2: memref<8x128xf32, #tpu.memory_space<vmem>>, %arg3: memref<8x128xf32, #tpu.memory_space<vmem>>, %arg4: memref<4x8x128xf32, #tpu.memory_space<vmem>>, %arg5: memref<4x8x128xf32, #tpu.memory_space<vmem>>) attributes {dimension_semantics = [#tpu.dimension_semantics<parallel>, #tpu.dimension_semantics<parallel>], iteration_bounds = array<i64: 1, 1>, scalar_prefetch = 0 : i64, scratch_operands = 0 : i64, tpu.core_type = #tpu.core_type<tc>, window_params = [{transform_indices = @transform_0, window_bounds = array<i64: 8, 128>}, {transform_indices = @transform_1, window_bounds = array<i64: 8, 128>}, {transform_indices = @transform_2, window_bounds = array<i64: 4, 8, 128>}, {transform_indices = @transform_3, window_bounds = array<i64: 4, 8, 128>}]} {
    %c0 = arith.constant 0 : index
    %c0_0 = arith.constant 0 : index
    %0 = vector.load %arg2[%c0, %c0_0] : memref<8x128xf32, #tpu.memory_space<vmem>>, vector<8x128xf32>
    %c0_1 = arith.constant 0 : index
    %c0_2 = arith.constant 0 : index
    %1 = vector.load %arg3[%c0_1, %c0_2] : memref<8x128xf32, #tpu.memory_space<vmem>>, vector<8x128xf32>
    %c0_3 = arith.constant 0 : index
    %c0_4 = arith.constant 0 : index
    %c0_5 = arith.constant 0 : index
    %2 = vector.load %arg4[%c0_3, %c0_4, %c0_5] : memref<4x8x128xf32, #tpu.memory_space<vmem>>, vector<4x8x128xf32>
    %3 = vector.shape_cast %1 : vector<8x128xf32> to vector<1x8x128xf32>
    %4 = vector.broadcast %3 : vector<1x8x128xf32> to vector<4x8x128xf32>
    %5 = arith.mulf %4, %2 : vector<4x8x128xf32>
    %6 = vector.shape_cast %0 : vector<8x128xf32> to vector<1x8x128xf32>
    %7 = vector.broadcast %6 : vector<1x8x128xf32> to vector<4x8x128xf32>
    %8 = arith.addf %7, %5 : vector<4x8x128xf32>
    %c0_6 = arith.constant 0 : index
    %c0_7 = arith.constant 0 : index
    %c0_8 = arith.constant 0 : index
    %9 = vector.load %arg5[%c0_6, %c0_7, %c0_8] : memref<4x8x128xf32, #tpu.memory_space<vmem>>, vector<4x8x128xf32>
    tpu.vector_store %arg5[%c0_6, %c0_7, %c0_8], %8 {strides = array<i32>} : memref<4x8x128xf32, #tpu.memory_space<vmem>>, vector<4x8x128xf32>,
    return
  }
  func.func @transform_0(%arg0: i32, %arg1: i32) -> (i32, i32) {
    %c0_i32 = arith.constant 0 : i32
    %c0_i32_0 = arith.constant 0 : i32
    return %c0_i32, %arg1 : i32, i32
  }
  func.func @transform_1(%arg0: i32, %arg1: i32) -> (i32, i32) {
    %c0_i32 = arith.constant 0 : i32
    %c0_i32_0 = arith.constant 0 : i32
    return %c0_i32, %arg1 : i32, i32
  }
  func.func @transform_2(%arg0: i32, %arg1: i32) -> (i32, i32, i32) {
    %c0_i32 = arith.constant 0 : i32
    %c0_i32_0 = arith.constant 0 : i32
    return %arg0, %c0_i32, %arg1 : i32, i32, i32
  }
  func.func @transform_3(%arg0: i32, %arg1: i32) -> (i32, i32, i32) {
    %c0_i32 = arith.constant 0 : i32
    %c0_i32_0 = arith.constant 0 : i32
    return %arg0, %c0_i32, %arg1 : i32, i32, i32
  }
}

</mosaic_0001>

<llo_original>
// kernel: mfvi_linear_forward.3
$region0: #{mfvi_linear_forward.3}
  #allocation0 [shape = 'u32[]', space=smem, size = 0x4, offset = 0x4, fixed_abs, tag = 'smem constant byte address 0x4 - core index']
  #allocation1 [shape = 'u32[144,128]{1,0:T(1,128)}', space=vmem, size = 0x12000, scoped, tag = 'internal scratch']
  %s0 = inlined_call_operand.vmem [shape: f32[8,128], index: 0, kind: input, shape index: {}]
  %s1 = inlined_call_operand.vmem [shape: f32[8,128], index: 1, kind: input, shape index: {}]
  %s2 = inlined_call_operand.vmem [shape: f32[4,8,128], index: 2, kind: input, shape index: {}]
  %s3 = inlined_call_operand.hbm [shape: f32[4,8,128], index: 3, kind: output, shape index: {}]
  %s4 = sld [smem:[#allocation0]]
  $region22: #{mfvi_linear_forward.3} parent=0
    _
  %s6 = ssub.s32 1, %s4
  %s7 = scalar_select 0, %s6, %s4
  $region1: #{mfvi_linear_forward.3} parent=0
    #allocation2 [shape = 'u8[16384]{0}', space=vmem, size = 0x4000, scoped, tag = 'output window, operand 0, single buffered']
    #allocation3 [shape = 's32[1]{0}', space=sflag, size = 0x4, scoped, tag = 'scoped memory for mfvi_linear_forward.3']
    %8 = vsyncpa [#allocation3], 0
    // Predicated region
    $region2: #{mfvi_linear_forward.3} parent=1 // pred_check
      _
    $region3: #{mfvi_linear_forward.3} parent=1 // pred_check_branch
      %10 = sbr.rel (0) target = $region5
    $region4: #{mfvi_linear_forward.3} parent=1 // pred_region
      _
    $region5: #{mfvi_linear_forward.3} parent=1 // pred_fallthru
      _
    // Predicated region
    $region6: #{mfvi_linear_forward.3} parent=1 // pred_check
      _
    $region7: #{mfvi_linear_forward.3} parent=1 // pred_check_branch
      %12 = sbr.rel (0) target = $region9
    $region8: #{mfvi_linear_forward.3} parent=1 // pred_region
      _
    $region9: #{mfvi_linear_forward.3} parent=1 // pred_fallthru
      _
    // Predicated region
    $region10: #{mfvi_linear_forward.3} parent=1 // pred_check
      _
    $region11: #{mfvi_linear_forward.3} parent=1 // pred_check_branch
      %14 = sbr.rel (0) target = $region13
    $region12: #{mfvi_linear_forward.3} parent=1 // pred_region
      _
    $region13: #{mfvi_linear_forward.3} parent=1 // pred_fallthru
      _
    %v15 = vld [vmem:[%s0] sm:$0xff]
    %v16 = vld [vmem:[%s1] sm:$0xff]
    %v17 = vld [vmem:[%s2] sm:$0xff]
    %v18 = vld [vmem:[%s2 + $0x8] sm:$0xff]
    %v19 = vld [vmem:[%s2 + $0x10] sm:$0xff]
    %v20 = vld [vmem:[%s2 + $0x18] sm:$0xff]
    %v21 = vmul.f32 %v16, %v17
    %v22 = vmul.f32 %v16, %v18
    %v23 = vmul.f32 %v16, %v19
    %v24 = vmul.f32 %v16, %v20
    %v25 = vadd.f32 %v15, %v21
    %v26 = vadd.f32 %v15, %v22
    %v27 = vadd.f32 %v15, %v23
    %v28 = vadd.f32 %v15, %v24
    %29 = vst [vmem:[#allocation2] sm:$0xff] %v25
    %30 = vst [vmem:[#allocation2 + $0x8] sm:$0xff] %v26
    %31 = vst [vmem:[#allocation2 + $0x10] sm:$0xff] %v27
    %32 = vst [vmem:[#allocation2 + $0x18] sm:$0xff] %v28
    // Predicated region
    $region14: #{mfvi_linear_forward.3} parent=1 // pred_check
      _
    $region15: #{mfvi_linear_forward.3} parent=1 // pred_check_branch
      %34 = sbr.rel (0) target = $region17
    $region16: #{mfvi_linear_forward.3} parent=1 // pred_region
      %s36 = ssub.s32 512, 512
      %37 = vsyncadd [#allocation3], %s36
      %s38 = sshll.u32 [#allocation2], 4
      %s39 = int_to_ptr.vmem [resolvable:$true] %s38
      %44 = dma.vmem_to_hbm [thread:$0]  %s39, 512, %s3, [#allocation3], 128, 128, 8
    $region17: #{mfvi_linear_forward.3} parent=1 // pred_fallthru
      _
    // Predicated region
    $region18: #{mfvi_linear_forward.3} parent=1 // pred_check
      _
    $region19: #{mfvi_linear_forward.3} parent=1 // pred_check_branch
      %46 = sbr.rel (0) target = $region21
    $region20: #{mfvi_linear_forward.3} parent=1 // pred_region
      %47 = dma.done [#allocation3], 512
    $region21: #{mfvi_linear_forward.3} parent=1 // pred_fallthru
      _
    %48 = vsyncpa [#allocation3], 1

// kernel: mfvi_linear_forward.2
$region0: #{mfvi_linear_forward.2}
  #allocation0 [shape = 'u32[]', space=smem, size = 0x4, offset = 0x4, fixed_abs, tag = 'smem constant byte address 0x4 - core index']
  #allocation1 [shape = 'u32[144,128]{1,0:T(1,128)}', space=vmem, size = 0x12000, scoped, tag = 'internal scratch']
  #allocation2 [shape = 'f32[8,128]{1,0:T(8,128)}', space=vmem, size = 0x1000, scoped, tag = 'scratch operand']
  #allocation3 [shape = 'f32[8,128]{1,0:T(8,128)}', space=vmem, size = 0x1000, scoped, tag = 'scratch operand']
  %s0 = inlined_call_operand.vmem [shape: f32[8,64], index: 0, kind: input, shape index: {}]
  %s1 = inlined_call_operand.vmem [shape: bf16[64,128], index: 1, kind: input, shape index: {}]
  %s2 = inlined_call_operand.vmem [shape: bf16[64,128], index: 2, kind: input, shape index: {}]
  %s3 = inlined_call_operand.vmem [shape: f32[1,128], index: 3, kind: input, shape index: {}]
  %s4 = inlined_call_operand.vmem [shape: f32[1,128], index: 4, kind: input, shape index: {}]
  %s5 = inlined_call_operand.vmem [shape: f32[8,128], index: 5, kind: output, shape index: {0}]
  %s6 = inlined_call_operand.vmem [shape: f32[8,128], index: 6, kind: output, shape index: {1}]
  %7 = xla_tuple %s5, %s6
  %s8 = sld [smem:[#allocation0]]
  $region46: #{mfvi_linear_forward.2} parent=0
    _
  %s10 = ssub.s32 1, %s8
  %s11 = scalar_select 0, %s10, %s8
  // Predicated region
  $region2: #{mfvi_linear_forward.2} parent=0 // pred_check
    _
  $region3: #{mfvi_linear_forward.2} parent=0 // pred_check_branch
    %13 = sbr.rel (0) target = $region5
  $region4: #{mfvi_linear_forward.2} parent=0 // pred_region
    _
  $region5: #{mfvi_linear_forward.2} parent=0 // pred_fallthru
    _
  // Predicated region
  $region6: #{mfvi_linear_forward.2} parent=0 // pred_check
    _
  $region7: #{mfvi_linear_forward.2} parent=0 // pred_check_branch
    %15 = sbr.rel (0) target = $region9
  $region8: #{mfvi_linear_forward.2} parent=0 // pred_region
    _
  $region9: #{mfvi_linear_forward.2} parent=0 // pred_fallthru
    _
  // Predicated region
  $region10: #{mfvi_linear_forward.2} parent=0 // pred_check
    _
  $region11: #{mfvi_linear_forward.2} parent=0 // pred_check_branch
    %17 = sbr.rel (0) target = $region13
  $region12: #{mfvi_linear_forward.2} parent=0 // pred_region
    _
  $region13: #{mfvi_linear_forward.2} parent=0 // pred_fallthru
    _
  // Predicated region
  $region14: #{mfvi_linear_forward.2} parent=0 // pred_check
    _
  $region15: #{mfvi_linear_forward.2} parent=0 // pred_check_branch
    %19 = sbr.rel (0) target = $region17
  $region16: #{mfvi_linear_forward.2} parent=0 // pred_region
    _
  $region17: #{mfvi_linear_forward.2} parent=0 // pred_fallthru
    _
  // Predicated region
  $region18: #{mfvi_linear_forward.2} parent=0 // pred_check
    _
  $region19: #{mfvi_linear_forward.2} parent=0 // pred_check_branch
    %21 = sbr.rel (0) target = $region21
  $region20: #{mfvi_linear_forward.2} parent=0 // pred_region
    _
  $region21: #{mfvi_linear_forward.2} parent=0 // pred_fallthru
    _
  %p23 = scmp.eq.s32.totalorder 0, 0
  // Predicated region
  $region22: #{mfvi_linear_forward.2} parent=0 // pred_check
    %p24 = pneg %p23
  $region23: #{mfvi_linear_forward.2} parent=0 // pred_check_branch
    %26 = sbr.rel (%p24) target = $region25
  $region24: #{mfvi_linear_forward.2} parent=0 // pred_region
    %27 = vst [vmem:[#allocation2] sm:$0xff] 0.0
    %28 = vst [vmem:[#allocation3] sm:$0xff] 0.0
  $region25: #{mfvi_linear_forward.2} parent=0 // pred_fallthru
    _
  %v29 = vld [vmem:[%s0] sm:$0xff]
  %v30 = vld [vmem:[#allocation2] sm:$0xff]
  %v31 = vpack.c.bf16 %v29, %v29
  %v32 = vld [vmem:[%s1] sm:$0xf]
  %v33 = vld [vmem:[%s1 + $0x4] sm:$0xf]
  %v34 = vld [vmem:[%s1 + $0x8] sm:$0xf]
  %v35 = vld [vmem:[%s1 + $0xc] sm:$0xf]
  %v36 = vld [vmem:[%s1 + $0x10] sm:$0xf]
  %v37 = vld [vmem:[%s1 + $0x14] sm:$0xf]
  %v38 = vld [vmem:[%s1 + $0x18] sm:$0xf]
  %v39 = vld [vmem:[%s1 + $0x1c] sm:$0xf]
  %v48 = vunpack.c.l.b16 %v32
  %v49 = vunpack.c.l.b16 %v33
  %v50 = vunpack.c.l.b16 %v34
  %v51 = vunpack.c.l.b16 %v35
  %v52 = vunpack.c.l.b16 %v36
  %v53 = vunpack.c.l.b16 %v37
  %v54 = vunpack.c.l.b16 %v38
  %v55 = vunpack.c.l.b16 %v39
  %v56 = vpack.c.b16 %v49, %v48
  %v57 = vpack.c.b16 %v51, %v50
  %v58 = vpack.c.b16 %v53, %v52
  %v59 = vpack.c.b16 %v55, %v54
  %vm64 = vcmask 523264
  %v66 = vsel %vm64, %v31, 0
  %68 = vmatprep.subr.bf16.mxu0 0
  %69 = vmatpush1.bf16.msra.mxu0 %v56
  %70 = vmatprep.subr.bf16.mxu0 0
  %71 = vmatpush1.bf16.msra.mxu0 %v57
  %72 = vmatprep.subr.bf16.mxu0 0
  %73 = vmatpush1.bf16.msra.mxu0 %v58
  %74 = vmatprep.subr.bf16.mxu0 0
  %75 = vmatpush1.bf16.msra.mxu0 %v59
  %76 = vmatprep.subr.bf16.mxu0 0
  %77 = vmatpush1.bf16.msra.mxu0 0
  %78 = vmatprep.subr.bf16.mxu0 0
  %79 = vmatpush1.bf16.msra.mxu0 0
  %80 = vmatprep.subr.bf16.mxu0 0
  %81 = vmatpush1.bf16.msra.mxu0 0
  %82 = vmatprep.subr.bf16.mxu0 0
  %83 = vmatpush1.bf16.msra.mxu0 0
  %84 = vmatprep.subr.bf16.mxu0 0
  %85 = vmatpush1.bf16.msra.mxu0 0
  %86 = vmatprep.subr.bf16.mxu0 0
  %87 = vmatpush1.bf16.msra.mxu0 0
  %88 = vmatprep.subr.bf16.mxu0 0
  %89 = vmatpush1.bf16.msra.mxu0 0
  %90 = vmatprep.subr.bf16.mxu0 0
  %91 = vmatpush1.bf16.msra.mxu0 0
  %92 = vmatprep.subr.bf16.mxu0 0
  %93 = vmatpush1.bf16.msra.mxu0 0
  %94 = vmatprep.subr.bf16.mxu0 0
  %95 = vmatpush1.bf16.msra.mxu0 0
  %96 = vmatprep.subr.bf16.mxu0 0
  %97 = vmatpush1.bf16.msra.mxu0 0
  %98 = vmatprep.subr.bf16.mxu0 0
  %99 = vmatpush1.bf16.msra.mxu0 0
  %100 = vmatprep.mubr.bf16.mxu0 0
  %101 = vmatmul.mubr.bf16.gmra.mrb[0].mxu0 %v66
  %v102 = vpop.f32.mrb[0].mxu0
  %v103 = vadd.f32 0.0, %v102
  %v104 = vpop.f32.mrb[0].mxu0
  %v105 = vpop.f32.mrb[0].mxu0
  %v106 = vpop.f32.mrb[0].mxu0
  %107 = vdwg.mxu0
  %v108 = vadd.f32 %v30, %v103
  %109 = vst [vmem:[#allocation2] sm:$0xff] %v108
  %v110 = vld [vmem:[#allocation3] sm:$0xff]
  %v111 = vmul.f32 %v29, %v29
  %v112 = vpack.c.bf16 %v111, %v111
  %v113 = vld [vmem:[%s2] sm:$0xf]
  %v114 = vld [vmem:[%s2 + $0x4] sm:$0xf]
  %v115 = vld [vmem:[%s2 + $0x8] sm:$0xf]
  %v116 = vld [vmem:[%s2 + $0xc] sm:$0xf]
  %v117 = vld [vmem:[%s2 + $0x10] sm:$0xf]
  %v118 = vld [vmem:[%s2 + $0x14] sm:$0xf]
  %v119 = vld [vmem:[%s2 + $0x18] sm:$0xf]
  %v120 = vld [vmem:[%s2 + $0x1c] sm:$0xf]
  %v129 = vunpack.c.l.b16 %v113
  %v130 = vunpack.c.l.b16 %v114
  %v131 = vunpack.c.l.b16 %v115
  %v132 = vunpack.c.l.b16 %v116
  %v133 = vunpack.c.l.b16 %v117
  %v134 = vunpack.c.l.b16 %v118
  %v135 = vunpack.c.l.b16 %v119
  %v136 = vunpack.c.l.b16 %v120
  %v137 = vpack.c.b16 %v130, %v129
  %v138 = vpack.c.b16 %v132, %v131
  %v139 = vpack.c.b16 %v134, %v133
  %v140 = vpack.c.b16 %v136, %v135
  %v146 = vsel %vm64, %v112, 0
  %148 = vmatprep.subr.bf16.mxu0 0
  %149 = vmatpush1.bf16.msra.mxu0 %v137
  %150 = vmatprep.subr.bf16.mxu0 0
  %151 = vmatpush1.bf16.msra.mxu0 %v138
  %152 = vmatprep.subr.bf16.mxu0 0
  %153 = vmatpush1.bf16.msra.mxu0 %v139
  %154 = vmatprep.subr.bf16.mxu0 0
  %155 = vmatpush1.bf16.msra.mxu0 %v140
  %156 = vmatprep.subr.bf16.mxu0 0
  %157 = vmatpush1.bf16.msra.mxu0 0
  %158 = vmatprep.subr.bf16.mxu0 0
  %159 = vmatpush1.bf16.msra.mxu0 0
  %160 = vmatprep.subr.bf16.mxu0 0
  %161 = vmatpush1.bf16.msra.mxu0 0
  %162 = vmatprep.subr.bf16.mxu0 0
  %163 = vmatpush1.bf16.msra.mxu0 0
  %164 = vmatprep.subr.bf16.mxu0 0
  %165 = vmatpush1.bf16.msra.mxu0 0
  %166 = vmatprep.subr.bf16.mxu0 0
  %167 = vmatpush1.bf16.msra.mxu0 0
  %168 = vmatprep.subr.bf16.mxu0 0
  %169 = vmatpush1.bf16.msra.mxu0 0
  %170 = vmatprep.subr.bf16.mxu0 0
  %171 = vmatpush1.bf16.msra.mxu0 0
  %172 = vmatprep.subr.bf16.mxu0 0
  %173 = vmatpush1.bf16.msra.mxu0 0
  %174 = vmatprep.subr.bf16.mxu0 0
  %175 = vmatpush1.bf16.msra.mxu0 0
  %176 = vmatprep.subr.bf16.mxu0 0
  %177 = vmatpush1.bf16.msra.mxu0 0
  %178 = vmatprep.subr.bf16.mxu0 0
  %179 = vmatpush1.bf16.msra.mxu0 0
  %180 = vmatprep.mubr.bf16.mxu0 0
  %181 = vmatmul.mubr.bf16.gmra.mrb[0].mxu0 %v146
  %v182 = vpop.f32.mrb[0].mxu0
  %v183 = vadd.f32 0.0, %v182
  %v184 = vpop.f32.mrb[0].mxu0
  %v185 = vpop.f32.mrb[0].mxu0
  %v186 = vpop.f32.mrb[0].mxu0
  %187 = vdwg.mxu0
  %v188 = vadd.f32 %v110, %v183
  %189 = vst [vmem:[#allocation3] sm:$0xff] %v188
  // Predicated region
  $region26: #{mfvi_linear_forward.2} parent=0 // pred_check
    %p190 = pneg %p23
  $region27: #{mfvi_linear_forward.2} parent=0 // pred_check_branch
    %192 = sbr.rel (%p190) target = $region29
  $region28: #{mfvi_linear_forward.2} parent=0 // pred_region
    %v193 = vld [vmem:[#allocation2] sm:$0xff]
    %v194 = vld [vmem:[%s3] sm:$0x1]
    %v196 = vlaneseq
    %v197 = vshrl.u32 %v196, 7
    %v198 = vsub.s32 0, %v197
    %v199 = vrot.slane %v194, %v198
    %v201 = vadd.f32 %v193, %v199
    %202 = vst [vmem:[%s5] sm:$0xff] %v201
    %v203 = vld [vmem:[#allocation3] sm:$0xff]
    %v204 = vld [vmem:[%s4] sm:$0x1]
    %v206 = vlaneseq
    %v207 = vshrl.u32 %v206, 7
    %v208 = vsub.s32 0, %v207
    %v209 = vrot.slane %v204, %v208
    %v211 = vadd.f32 %v203, %v209
    %v212 = vrsqrt.pop %v211
    %v213 = vmul.f32 %v211, %v212
    %vm214 = vcmp.eq.f32.partialorder %v211, inf
    %v215 = vsel %vm214, %v211, %v213
    %vm216 = vcmp.eq.f32.partialorder %v211, 0.0
    %v217 = vand.u32 %v211, 2147483648
    %v218 = vsel %vm216, %v217, %v215
    %219 = vst [vmem:[%s6] sm:$0xff] %v218
  $region29: #{mfvi_linear_forward.2} parent=0 // pred_fallthru
    _
  // Predicated region
  $region30: #{mfvi_linear_forward.2} parent=0 // pred_check
    _
  $region31: #{mfvi_linear_forward.2} parent=0 // pred_check_branch
    %221 = sbr.rel (0) target = $region33
  $region32: #{mfvi_linear_forward.2} parent=0 // pred_region
    _
  $region33: #{mfvi_linear_forward.2} parent=0 // pred_fallthru
    _
  // Predicated region
  $region34: #{mfvi_linear_forward.2} parent=0 // pred_check
    _
  $region35: #{mfvi_linear_forward.2} parent=0 // pred_check_branch
    %223 = sbr.rel (0) target = $region37
  $region36: #{mfvi_linear_forward.2} parent=0 // pred_region
    _
  $region37: #{mfvi_linear_forward.2} parent=0 // pred_fallthru
    _
  // Predicated region
  $region38: #{mfvi_linear_forward.2} parent=0 // pred_check
    _
  $region39: #{mfvi_linear_forward.2} parent=0 // pred_check_branch
    %225 = sbr.rel (0) target = $region41
  $region40: #{mfvi_linear_forward.2} parent=0 // pred_region
    _
  $region41: #{mfvi_linear_forward.2} parent=0 // pred_fallthru
    _
  // Predicated region
  $region42: #{mfvi_linear_forward.2} parent=0 // pred_check
    _
  $region43: #{mfvi_linear_forward.2} parent=0 // pred_check_branch
    %227 = sbr.rel (0) target = $region45
  $region44: #{mfvi_linear_forward.2} parent=0 // pred_region
    _
  $region45: #{mfvi_linear_forward.2} parent=0 // pred_fallthru
    _

</llo_original>
